<compile_context>
chip_gen: v5e
topology: v5e:2x2
jax: 0.10.0
libtpu: 0.0.40
codegen_flags: <defaults>
</compile_context>

<pallas_src>
import jax
import jax.numpy as jnp
from jax.experimental import pallas as pl
from jax.experimental.pallas import tpu as pltpu

IN_CH = 32           # in_ch
EMB_CH = 16          # emb_ch -> codebook size 2**16 (never materialized)
CODE_SCALE = 1.0

PACK = 128 // IN_CH          # original rows packed per 128-lane row (= 4)
LANES = PACK * IN_CH         # 128
PACK_EMB = PACK * EMB_CH     # 64


def _lfq_kernel(xp_ref, w_in_bd_ref, w_out_bd_ref, gbasis_ref, out_ref, idx_ref):
    # xp_ref:       (TR, 128) f32   -- 4 original rows (32 ch each) per vreg row
    # w_in_bd_ref:  (128, 64) f32   -- block_diag(4 x W_in.T)
    # w_out_bd_ref: (64, 128) f32   -- block_diag(4 x W_out.T)
    # gbasis_ref:   (64, 4)   f32   -- grouped 2**j basis
    # out_ref:      (TR, 128) f32
    # idx_ref:      (TR, 4)   i32
    xp = xp_ref[...]

    # linear_in for 4 packed rows at once (MXU).
    z_e = jnp.dot(xp, w_in_bd_ref[...], preferred_element_type=jnp.float32)

    # quantize: sign -> +/- code_scale (forward value of the straight-through op).
    pos = z_e > 0.0
    z_q = jnp.where(pos, jnp.float32(CODE_SCALE), jnp.float32(-CODE_SCALE))

    # linear_out (MXU); lane-dense (TR, 128) store.
    out_ref[...] = jnp.dot(z_q, w_out_bd_ref[...],
                           preferred_element_type=jnp.float32)

    # indices: for packed group g, sum_j pos[:, 16g+j] * 2**j, via a tiny matmul.
    # Operands are exact {0,1} and powers of two, result <= 65535 -> exact in f32.
    idx_f = jnp.dot(pos.astype(jnp.float32), gbasis_ref[...],
                    preferred_element_type=jnp.float32)
    idx_ref[...] = jnp.round(idx_f).astype(jnp.int32)


def _block_diag(w, k):
    """(a, b) -> (k*a, k*b) with k copies of w on the diagonal."""
    a, b = w.shape
    eye = jnp.eye(k, dtype=w.dtype)
    return jnp.einsum("ij,pq->ipjq", eye, w).reshape(k * a, k * b)


def lfq_forward(z, w_in, w_out, *, tm=8192):
    """z: (B, N, IN_CH) f32; w_in: (EMB_CH, IN_CH); w_out: (IN_CH, EMB_CH).
    Returns (z_q_out (B,N,IN_CH) f32, indices (B,N) i32, loss 0.0)."""
    B, N, C = z.shape
    assert C == IN_CH and LANES == 128
    M = B * N

    # Row tile (in original rows): large enough to amortize the ~0.35 us
    # per-grid-step overhead of this bandwidth-bound kernel (tm=8192 -> 1 MiB
    # input block, ~6 MiB of double-buffered pipeline VMEM -> fits the default
    # scoped VMEM on v5e/v6e/v7x). Clamp down for tiny M to avoid huge padding.
    tm = max(512, min(tm, pl.cdiv(M, 512) * 512))
    M_pad = pl.cdiv(M, tm) * tm
    TR = tm // PACK                      # packed rows per grid step (multiple of 128)

    x = z.reshape(M, C).astype(jnp.float32)
    if M_pad != M:
        x = jnp.concatenate([x, jnp.zeros((M_pad - M, C), jnp.float32)], axis=0)
    xp = x.reshape(M_pad // PACK, LANES)                 # free row-major repack

    w_in_bd = _block_diag(jnp.transpose(w_in).astype(jnp.float32), PACK)    # (128, 64)
    w_out_bd = _block_diag(jnp.transpose(w_out).astype(jnp.float32), PACK)  # (64, 128)
    gbasis = _block_diag(
        (2.0 ** jnp.arange(EMB_CH, dtype=jnp.float32)).reshape(EMB_CH, 1), PACK)  # (64, 4)

    out_p, idx_p = pl.pallas_call(
        _lfq_kernel,
        out_shape=(
            jax.ShapeDtypeStruct((M_pad // PACK, LANES), jnp.float32),
            jax.ShapeDtypeStruct((M_pad // PACK, PACK), jnp.int32),
        ),
        grid_spec=pltpu.PrefetchScalarGridSpec(
            num_scalar_prefetch=0,
            grid=(M_pad // tm,),
            in_specs=[
                pl.BlockSpec((TR, LANES), lambda i: (i, 0)),
                # Constant index_maps: weights stay resident in VMEM across steps.
                pl.BlockSpec((LANES, PACK_EMB), lambda i: (0, 0)),
                pl.BlockSpec((PACK_EMB, LANES), lambda i: (0, 0)),
                pl.BlockSpec((PACK_EMB, PACK), lambda i: (0, 0)),
            ],
            out_specs=[
                pl.BlockSpec((TR, LANES), lambda i: (i, 0)),
                pl.BlockSpec((TR, PACK), lambda i: (i, 0)),
            ],
        ),
        compiler_params=pltpu.CompilerParams(
            dimension_semantics=("parallel",)),   # lets v7x shard the loop over 2 TCs
    )(xp, w_in_bd, w_out_bd, gbasis)

    z_q_out = out_p.reshape(M_pad, C)[:M].reshape(B, N, C)
    indices = idx_p.reshape(M_pad)[:M].reshape(B, N)
    loss = jnp.float32(0.0)  # entropy_weight=0, commitment_weight=0 (defaults)
    # TODO(synk): straight-through gradient (custom_vjp) not implemented; forward only.
    # TODO(synk): entropy / commitment loss branches not implemented (inactive at defaults).
    return z_q_out, indices, loss


def _reference(z, w_in, w_out):
    z_e = jnp.einsum("bnc,ec->bne", z, w_in)
    z_q = jnp.where(z_e > 0.0, CODE_SCALE, -CODE_SCALE).astype(jnp.float32)
    basis = (2 ** jnp.arange(EMB_CH)).astype(jnp.int32)
    idx = jnp.sum((z_e > 0.0).astype(jnp.int32) * basis, axis=-1)
    out = jnp.einsum("bne,ce->bnc", z_q, w_out)
    return out, idx


if __name__ == "__main__":
    key = jax.random.PRNGKey(0)
    k_z, k_win, k_wout = jax.random.split(key, 3)

    B, N = 2, 8
    z = jax.random.normal(k_z, (B, N, IN_CH), dtype=jnp.float32)
    # Deterministic synthetic Linear weights (PyTorch Linear weight shapes).
    w_in = jax.random.normal(k_win, (EMB_CH, IN_CH), dtype=jnp.float32) * 0.1
    w_out = jax.random.normal(k_wout, (IN_CH, EMB_CH), dtype=jnp.float32) * 0.1

    fwd = jax.jit(lfq_forward)
    z_q_out, indices, loss = jax.block_until_ready(fwd(z, w_in, w_out))

    ref_out, ref_idx = _reference(z, w_in, w_out)
    assert z_q_out.shape == (B, N, IN_CH) and indices.shape == (B, N)
    assert jnp.allclose(z_q_out, ref_out, atol=1e-4, rtol=1e-4)
    assert jnp.array_equal(indices, ref_idx)
    assert float(loss) == 0.0

    # Second check: M not a multiple of the pack/tile factor -> exercises padding path.
    B2, N2 = 2, 37
    z2 = jax.random.normal(jax.random.PRNGKey(1), (B2, N2, IN_CH), dtype=jnp.float32)
    z_q2, idx2, _ = jax.block_until_ready(fwd(z2, w_in, w_out))
    ref_out2, ref_idx2 = _reference(z2, w_in, w_out)
    assert jnp.allclose(z_q2, ref_out2, atol=1e-4, rtol=1e-4)
    assert jnp.array_equal(idx2, ref_idx2)

    print("KERNEL_OK")
</pallas_src>

<mosaic_0001>
module attributes {stable_mosaic.version = 11 : i64} {
  func.func @_lfq_kernel(%arg0: i32, %arg1: memref<128x128xf32, #tpu.memory_space<vmem>>, %arg2: memref<128x64xf32, #tpu.memory_space<vmem>>, %arg3: memref<64x128xf32, #tpu.memory_space<vmem>>, %arg4: memref<64x4xf32, #tpu.memory_space<vmem>>, %arg5: memref<128x128xf32, #tpu.memory_space<vmem>>, %arg6: memref<128x4xi32, #tpu.memory_space<vmem>>) attributes {dimension_semantics = [#tpu.dimension_semantics<parallel>], iteration_bounds = array<i64: 1>, scalar_prefetch = 0 : i64, scratch_operands = 0 : i64, tpu.core_type = #tpu.core_type<tc>, window_params = [{transform_indices = @transform_0, window_bounds = array<i64: 128, 128>}, {pipeline_mode = #tpu.pipeline_mode<synchronous>, transform_indices = @transform_1, window_bounds = array<i64: 128, 64>}, {pipeline_mode = #tpu.pipeline_mode<synchronous>, transform_indices = @transform_2, window_bounds = array<i64: 64, 128>}, {pipeline_mode = #tpu.pipeline_mode<synchronous>, transform_indices = @transform_3, window_bounds = array<i64: 64, 4>}, {transform_indices = @transform_4, window_bounds = array<i64: 128, 128>}, {transform_indices = @transform_5, window_bounds = array<i64: 128, 4>}]} {
    %c0 = arith.constant 0 : index
    %c0_0 = arith.constant 0 : index
    %0 = vector.load %arg1[%c0, %c0_0] : memref<128x128xf32, #tpu.memory_space<vmem>>, vector<128x128xf32>
    %c0_1 = arith.constant 0 : index
    %c0_2 = arith.constant 0 : index
    %1 = vector.load %arg2[%c0_1, %c0_2] : memref<128x64xf32, #tpu.memory_space<vmem>>, vector<128x64xf32>
    %cst = arith.constant dense<0.000000e+00> : vector<128x64xf32>
    %2 = tpu.matmul %0, %1, %cst {dimension_numbers = #tpu.dot_dimension_numbers<[1], [0], [0], [1], [0, 0, 1, 1], [], []>} : vector<128x128xf32>, vector<128x64xf32>, vector<128x64xf32> -> vector<128x64xf32>
    %cst_3 = arith.constant 0.000000e+00 : f32
    %3 = vector.broadcast %cst_3 : f32 to vector<128x64xf32>
    %4 = arith.cmpf ogt, %2, %3 : vector<128x64xf32>
    %cst_4 = arith.constant 1.000000e+00 : f32
    %cst_5 = arith.constant -1.000000e+00 : f32
    %5 = vector.broadcast %cst_4 : f32 to vector<128x64xf32>
    %6 = vector.broadcast %cst_5 : f32 to vector<128x64xf32>
    %7 = arith.select %4, %5, %6 : vector<128x64xi1>, vector<128x64xf32>
    %c0_6 = arith.constant 0 : index
    %c0_7 = arith.constant 0 : index
    %8 = vector.load %arg3[%c0_6, %c0_7] : memref<64x128xf32, #tpu.memory_space<vmem>>, vector<64x128xf32>
    %cst_8 = arith.constant dense<0.000000e+00> : vector<128x128xf32>
    %9 = tpu.matmul %7, %8, %cst_8 {dimension_numbers = #tpu.dot_dimension_numbers<[1], [0], [0], [1], [0, 0, 1, 1], [], []>} : vector<128x64xf32>, vector<64x128xf32>, vector<128x128xf32> -> vector<128x128xf32>
    %c0_9 = arith.constant 0 : index
    %c0_10 = arith.constant 0 : index
    %10 = vector.load %arg5[%c0_9, %c0_10] : memref<128x128xf32, #tpu.memory_space<vmem>>, vector<128x128xf32>
    tpu.vector_store %arg5[%c0_9, %c0_10], %9 {strides = array<i32>} : memref<128x128xf32, #tpu.memory_space<vmem>>, vector<128x128xf32>,
    %11 = arith.extui %4 : vector<128x64xi1> to vector<128x64xi32>
    %12 = arith.sitofp %11 : vector<128x64xi32> to vector<128x64xf32>
    %c0_11 = arith.constant 0 : index
    %c0_12 = arith.constant 0 : index
    %13 = vector.load %arg4[%c0_11, %c0_12] : memref<64x4xf32, #tpu.memory_space<vmem>>, vector<64x4xf32>
    %cst_13 = arith.constant dense<0.000000e+00> : vector<128x4xf32>
    %14 = tpu.matmul %12, %13, %cst_13 {dimension_numbers = #tpu.dot_dimension_numbers<[1], [0], [0], [1], [0, 0, 1, 1], [], []>} : vector<128x64xf32>, vector<64x4xf32>, vector<128x4xf32> -> vector<128x4xf32>
    %15 = math.roundeven %14 : vector<128x4xf32>
    %16 = arith.fptosi %15 : vector<128x4xf32> to vector<128x4xi32>
    %c0_14 = arith.constant 0 : index
    %c0_15 = arith.constant 0 : index
    %17 = vector.load %arg6[%c0_14, %c0_15] : memref<128x4xi32, #tpu.memory_space<vmem>>, vector<128x4xi32>
    tpu.vector_store %arg6[%c0_14, %c0_15], %16 {strides = array<i32>} : memref<128x4xi32, #tpu.memory_space<vmem>>, vector<128x4xi32>,
    return
  }
  func.func @transform_0(%arg0: i32) -> (i32, i32) {
    %c0_i32 = arith.constant 0 : i32
    %c0_i32_0 = arith.constant 0 : i32
    return %arg0, %c0_i32 : i32, i32
  }
  func.func @transform_1(%arg0: i32) -> (i32, i32) {
    %c0_i32 = arith.constant 0 : i32
    %c0_i32_0 = arith.constant 0 : i32
    %c0_i32_1 = arith.constant 0 : i32
    return %c0_i32, %c0_i32_0 : i32, i32
  }
  func.func @transform_2(%arg0: i32) -> (i32, i32) {
    %c0_i32 = arith.constant 0 : i32
    %c0_i32_0 = arith.constant 0 : i32
    %c0_i32_1 = arith.constant 0 : i32
    return %c0_i32, %c0_i32_0 : i32, i32
  }
  func.func @transform_3(%arg0: i32) -> (i32, i32) {
    %c0_i32 = arith.constant 0 : i32
    %c0_i32_0 = arith.constant 0 : i32
    %c0_i32_1 = arith.constant 0 : i32
    return %c0_i32, %c0_i32_0 : i32, i32
  }
  func.func @transform_4(%arg0: i32) -> (i32, i32) {
    %c0_i32 = arith.constant 0 : i32
    %c0_i32_0 = arith.constant 0 : i32
    return %arg0, %c0_i32 : i32, i32
  }
  func.func @transform_5(%arg0: i32) -> (i32, i32) {
    %c0_i32 = arith.constant 0 : i32
    %c0_i32_0 = arith.constant 0 : i32
    return %arg0, %c0_i32 : i32, i32
  }
}

</mosaic_0001>

<llo_original>
// kernel: lfq_forward.1
$region0: #{lfq_forward.1}
  #allocation0 [shape = 'u32[]', space=smem, size = 0x4, offset = 0x4, fixed_abs, tag = 'smem constant byte address 0x4 - core index']
  #allocation1 [shape = 'u32[72,128]{1,0:T(1,128)}', space=vmem, size = 0x9000, scoped, tag = 'internal scratch']
  %s0 = inlined_call_operand.vmem [shape: f32[128,128], index: 0, kind: input, shape index: {}]
  %s1 = inlined_call_operand.vmem [shape: f32[128,64], index: 1, kind: input, shape index: {}]
  %s2 = inlined_call_operand.vmem [shape: f32[64,128], index: 2, kind: input, shape index: {}]
  %s3 = inlined_call_operand.vmem [shape: f32[64,4], index: 3, kind: input, shape index: {}]
  %s4 = inlined_call_operand.vmem [shape: f32[128,128], index: 4, kind: output, shape index: {0}]
  %s5 = inlined_call_operand.vmem [shape: s32[128,4], index: 5, kind: output, shape index: {1}]
  %6 = xla_tuple %s4, %s5
  %s7 = sld [smem:[#allocation0]]
  $region34: #{lfq_forward.1} parent=0
    _
  %s9 = ssub.s32 1, %s7
  %s10 = scalar_select 0, %s9, %s7
  // Predicated region
  $region2: #{lfq_forward.1} parent=0 // pred_check
    _
  $region3: #{lfq_forward.1} parent=0 // pred_check_branch
    %12 = sbr.rel (0) target = $region5
  $region4: #{lfq_forward.1} parent=0 // pred_region
    _
  $region5: #{lfq_forward.1} parent=0 // pred_fallthru
    _
  // Predicated region
  $region6: #{lfq_forward.1} parent=0 // pred_check
    _
  $region7: #{lfq_forward.1} parent=0 // pred_check_branch
    %14 = sbr.rel (0) target = $region9
  $region8: #{lfq_forward.1} parent=0 // pred_region
    _
  $region9: #{lfq_forward.1} parent=0 // pred_fallthru
    _
  // Predicated region
  $region10: #{lfq_forward.1} parent=0 // pred_check
    _
  $region11: #{lfq_forward.1} parent=0 // pred_check_branch
    %16 = sbr.rel (0) target = $region13
  $region12: #{lfq_forward.1} parent=0 // pred_region
    _
  $region13: #{lfq_forward.1} parent=0 // pred_fallthru
    _
  // Predicated region
  $region14: #{lfq_forward.1} parent=0 // pred_check
    _
  $region15: #{lfq_forward.1} parent=0 // pred_check_branch
    %18 = sbr.rel (0) target = $region17
  $region16: #{lfq_forward.1} parent=0 // pred_region
    _
  $region17: #{lfq_forward.1} parent=0 // pred_fallthru
    _
  %v19 = vld [vmem:[%s0] sm:$0xff]
  %v20 = vld [vmem:[%s0 + $0x8] sm:$0xff]
  %v21 = vld [vmem:[%s0 + $0x10] sm:$0xff]
  %v22 = vld [vmem:[%s0 + $0x18] sm:$0xff]
  %v23 = vld [vmem:[%s0 + $0x20] sm:$0xff]
  %v24 = vld [vmem:[%s0 + $0x28] sm:$0xff]
  %v25 = vld [vmem:[%s0 + $0x30] sm:$0xff]
  %v26 = vld [vmem:[%s0 + $0x38] sm:$0xff]
  %v27 = vld [vmem:[%s0 + $0x40] sm:$0xff]
  %v28 = vld [vmem:[%s0 + $0x48] sm:$0xff]
  %v29 = vld [vmem:[%s0 + $0x50] sm:$0xff]
  %v30 = vld [vmem:[%s0 + $0x58] sm:$0xff]
  %v31 = vld [vmem:[%s0 + $0x60] sm:$0xff]
  %v32 = vld [vmem:[%s0 + $0x68] sm:$0xff]
  %v33 = vld [vmem:[%s0 + $0x70] sm:$0xff]
  %v34 = vld [vmem:[%s0 + $0x78] sm:$0xff]
  %v35 = vld [vmem:[%s1] sm:$0xff]
  %v36 = vld [vmem:[%s1 + $0x8] sm:$0xff]
  %v37 = vld [vmem:[%s1 + $0x10] sm:$0xff]
  %v38 = vld [vmem:[%s1 + $0x18] sm:$0xff]
  %v39 = vld [vmem:[%s1 + $0x20] sm:$0xff]
  %v40 = vld [vmem:[%s1 + $0x28] sm:$0xff]
  %v41 = vld [vmem:[%s1 + $0x30] sm:$0xff]
  %v42 = vld [vmem:[%s1 + $0x38] sm:$0xff]
  %v43 = vld [vmem:[%s1 + $0x40] sm:$0xff]
  %v44 = vld [vmem:[%s1 + $0x48] sm:$0xff]
  %v45 = vld [vmem:[%s1 + $0x50] sm:$0xff]
  %v46 = vld [vmem:[%s1 + $0x58] sm:$0xff]
  %v47 = vld [vmem:[%s1 + $0x60] sm:$0xff]
  %v48 = vld [vmem:[%s1 + $0x68] sm:$0xff]
  %v49 = vld [vmem:[%s1 + $0x70] sm:$0xff]
  %v50 = vld [vmem:[%s1 + $0x78] sm:$0xff]
  %51 = vmatpush.msra.mxu0 %v50
  %52 = vmatpush.msra.mxu0 %v49
  %53 = vmatpush.msra.mxu0 %v48
  %54 = vmatpush.msra.mxu0 %v47
  %55 = vmatpush.msra.mxu0 %v46
  %56 = vmatpush.msra.mxu0 %v45
  %57 = vmatpush.msra.mxu0 %v44
  %58 = vmatpush.msra.mxu0 %v43
  %59 = vmatpush.msra.mxu0 %v42
  %60 = vmatpush.msra.mxu0 %v41
  %61 = vmatpush.msra.mxu0 %v40
  %62 = vmatpush.msra.mxu0 %v39
  %63 = vmatpush.msra.mxu0 %v38
  %64 = vmatpush.msra.mxu0 %v37
  %65 = vmatpush.msra.mxu0 %v36
  %66 = vmatpush.msra.mxu0 %v35
  %67 = vmatmul.f32.gmra.mxu0 %v19
  %v68 = vpop.f32.mrf.mxu0
  %v69 = vadd.f32 0.0, %v68
  %70 = vmatmul.f32.gmra.mxu0 %v20
  %v71 = vpop.f32.mrf.mxu0
  %v72 = vadd.f32 0.0, %v71
  %73 = vmatmul.f32.gmra.mxu0 %v21
  %v74 = vpop.f32.mrf.mxu0
  %v75 = vadd.f32 0.0, %v74
  %76 = vmatmul.f32.gmra.mxu0 %v22
  %v77 = vpop.f32.mrf.mxu0
  %v78 = vadd.f32 0.0, %v77
  %79 = vmatmul.f32.gmra.mxu0 %v23
  %v80 = vpop.f32.mrf.mxu0
  %v81 = vadd.f32 0.0, %v80
  %82 = vmatmul.f32.gmra.mxu0 %v24
  %v83 = vpop.f32.mrf.mxu0
  %v84 = vadd.f32 0.0, %v83
  %85 = vmatmul.f32.gmra.mxu0 %v25
  %v86 = vpop.f32.mrf.mxu0
  %v87 = vadd.f32 0.0, %v86
  %88 = vmatmul.f32.gmra.mxu0 %v26
  %v89 = vpop.f32.mrf.mxu0
  %v90 = vadd.f32 0.0, %v89
  %91 = vmatmul.f32.gmra.mxu0 %v27
  %v92 = vpop.f32.mrf.mxu0
  %v93 = vadd.f32 0.0, %v92
  %94 = vmatmul.f32.gmra.mxu0 %v28
  %v95 = vpop.f32.mrf.mxu0
  %v96 = vadd.f32 0.0, %v95
  %97 = vmatmul.f32.gmra.mxu0 %v29
  %v98 = vpop.f32.mrf.mxu0
  %v99 = vadd.f32 0.0, %v98
  %100 = vmatmul.f32.gmra.mxu0 %v30
  %v101 = vpop.f32.mrf.mxu0
  %v102 = vadd.f32 0.0, %v101
  %103 = vmatmul.f32.gmra.mxu0 %v31
  %v104 = vpop.f32.mrf.mxu0
  %v105 = vadd.f32 0.0, %v104
  %106 = vmatmul.f32.gmra.mxu0 %v32
  %v107 = vpop.f32.mrf.mxu0
  %v108 = vadd.f32 0.0, %v107
  %109 = vmatmul.f32.gmra.mxu0 %v33
  %v110 = vpop.f32.mrf.mxu0
  %v111 = vadd.f32 0.0, %v110
  %112 = vmatmul.f32.gmra.mxu0 %v34
  %v113 = vpop.f32.mrf.mxu0
  %v114 = vadd.f32 0.0, %v113
  %115 = vdwg.mxu0
  %vm116 = vcmp.gt.f32.partialorder %v69, 0.0
  %vm117 = vcmp.gt.f32.partialorder %v72, 0.0
  %vm118 = vcmp.gt.f32.partialorder %v75, 0.0
  %vm119 = vcmp.gt.f32.partialorder %v78, 0.0
  %vm120 = vcmp.gt.f32.partialorder %v81, 0.0
  %vm121 = vcmp.gt.f32.partialorder %v84, 0.0
  %vm122 = vcmp.gt.f32.partialorder %v87, 0.0
  %vm123 = vcmp.gt.f32.partialorder %v90, 0.0
  %vm124 = vcmp.gt.f32.partialorder %v93, 0.0
  %vm125 = vcmp.gt.f32.partialorder %v96, 0.0
  %vm126 = vcmp.gt.f32.partialorder %v99, 0.0
  %vm127 = vcmp.gt.f32.partialorder %v102, 0.0
  %vm128 = vcmp.gt.f32.partialorder %v105, 0.0
  %vm129 = vcmp.gt.f32.partialorder %v108, 0.0
  %vm130 = vcmp.gt.f32.partialorder %v111, 0.0
  %vm131 = vcmp.gt.f32.partialorder %v114, 0.0
  %v132 = vsel %vm116, 1.0, -1.0
  %v133 = vsel %vm117, 1.0, -1.0
  %v134 = vsel %vm118, 1.0, -1.0
  %v135 = vsel %vm119, 1.0, -1.0
  %v136 = vsel %vm120, 1.0, -1.0
  %v137 = vsel %vm121, 1.0, -1.0
  %v138 = vsel %vm122, 1.0, -1.0
  %v139 = vsel %vm123, 1.0, -1.0
  %v140 = vsel %vm124, 1.0, -1.0
  %v141 = vsel %vm125, 1.0, -1.0
  %v142 = vsel %vm126, 1.0, -1.0
  %v143 = vsel %vm127, 1.0, -1.0
  %v144 = vsel %vm128, 1.0, -1.0
  %v145 = vsel %vm129, 1.0, -1.0
  %v146 = vsel %vm130, 1.0, -1.0
  %v147 = vsel %vm131, 1.0, -1.0
  %v148 = vld [vmem:[%s2] sm:$0xff]
  %v149 = vld [vmem:[%s2 + $0x8] sm:$0xff]
  %v150 = vld [vmem:[%s2 + $0x10] sm:$0xff]
  %v151 = vld [vmem:[%s2 + $0x18] sm:$0xff]
  %v152 = vld [vmem:[%s2 + $0x20] sm:$0xff]
  %v153 = vld [vmem:[%s2 + $0x28] sm:$0xff]
  %v154 = vld [vmem:[%s2 + $0x30] sm:$0xff]
  %v155 = vld [vmem:[%s2 + $0x38] sm:$0xff]
  %vm156 = vcmask 523264
  %v158 = vsel %vm156, %v132, 0
  %v161 = vsel %vm156, %v133, 0
  %v164 = vsel %vm156, %v134, 0
  %v167 = vsel %vm156, %v135, 0
  %v170 = vsel %vm156, %v136, 0
  %v173 = vsel %vm156, %v137, 0
  %v176 = vsel %vm156, %v138, 0
  %v179 = vsel %vm156, %v139, 0
  %v182 = vsel %vm156, %v140, 0
  %v185 = vsel %vm156, %v141, 0
  %v188 = vsel %vm156, %v142, 0
  %v191 = vsel %vm156, %v143, 0
  %v194 = vsel %vm156, %v144, 0
  %v197 = vsel %vm156, %v145, 0
  %v200 = vsel %vm156, %v146, 0
  %v203 = vsel %vm156, %v147, 0
  %205 = vmatpush.msra.mxu0 0.0
  %206 = vmatpush.msra.mxu0 0.0
  %207 = vmatpush.msra.mxu0 0.0
  %208 = vmatpush.msra.mxu0 0.0
  %209 = vmatpush.msra.mxu0 0.0
  %210 = vmatpush.msra.mxu0 0.0
  %211 = vmatpush.msra.mxu0 0.0
  %212 = vmatpush.msra.mxu0 0.0
  %213 = vmatpush.msra.mxu0 %v155
  %214 = vmatpush.msra.mxu0 %v154
  %215 = vmatpush.msra.mxu0 %v153
  %216 = vmatpush.msra.mxu0 %v152
  %217 = vmatpush.msra.mxu0 %v151
  %218 = vmatpush.msra.mxu0 %v150
  %219 = vmatpush.msra.mxu0 %v149
  %220 = vmatpush.msra.mxu0 %v148
  %221 = vmatmul.f32.gmra.mxu0 %v158
  %v222 = vpop.f32.mrf.mxu0
  %v223 = vadd.f32 0.0, %v222
  %224 = vmatmul.f32.gmra.mxu0 %v161
  %v225 = vpop.f32.mrf.mxu0
  %v226 = vadd.f32 0.0, %v225
  %227 = vmatmul.f32.gmra.mxu0 %v164
  %v228 = vpop.f32.mrf.mxu0
  %v229 = vadd.f32 0.0, %v228
  %230 = vmatmul.f32.gmra.mxu0 %v167
  %v231 = vpop.f32.mrf.mxu0
  %v232 = vadd.f32 0.0, %v231
  %233 = vmatmul.f32.gmra.mxu0 %v170
  %v234 = vpop.f32.mrf.mxu0
  %v235 = vadd.f32 0.0, %v234
  %236 = vmatmul.f32.gmra.mxu0 %v173
  %v237 = vpop.f32.mrf.mxu0
  %v238 = vadd.f32 0.0, %v237
  %239 = vmatmul.f32.gmra.mxu0 %v176
  %v240 = vpop.f32.mrf.mxu0
  %v241 = vadd.f32 0.0, %v240
  %242 = vmatmul.f32.gmra.mxu0 %v179
  %v243 = vpop.f32.mrf.mxu0
  %v244 = vadd.f32 0.0, %v243
  %245 = vmatmul.f32.gmra.mxu0 %v182
  %v246 = vpop.f32.mrf.mxu0
  %v247 = vadd.f32 0.0, %v246
  %248 = vmatmul.f32.gmra.mxu0 %v185
  %v249 = vpop.f32.mrf.mxu0
  %v250 = vadd.f32 0.0, %v249
  %251 = vmatmul.f32.gmra.mxu0 %v188
  %v252 = vpop.f32.mrf.mxu0
  %v253 = vadd.f32 0.0, %v252
  %254 = vmatmul.f32.gmra.mxu0 %v191
  %v255 = vpop.f32.mrf.mxu0
  %v256 = vadd.f32 0.0, %v255
  %257 = vmatmul.f32.gmra.mxu0 %v194
  %v258 = vpop.f32.mrf.mxu0
  %v259 = vadd.f32 0.0, %v258
  %260 = vmatmul.f32.gmra.mxu0 %v197
  %v261 = vpop.f32.mrf.mxu0
  %v262 = vadd.f32 0.0, %v261
  %263 = vmatmul.f32.gmra.mxu0 %v200
  %v264 = vpop.f32.mrf.mxu0
  %v265 = vadd.f32 0.0, %v264
  %266 = vmatmul.f32.gmra.mxu0 %v203
  %v267 = vpop.f32.mrf.mxu0
  %v268 = vadd.f32 0.0, %v267
  %269 = vdwg.mxu0
  %270 = vst [vmem:[%s4] sm:$0xff] %v223
  %271 = vst [vmem:[%s4 + $0x8] sm:$0xff] %v226
  %272 = vst [vmem:[%s4 + $0x10] sm:$0xff] %v229
  %273 = vst [vmem:[%s4 + $0x18] sm:$0xff] %v232
  %274 = vst [vmem:[%s4 + $0x20] sm:$0xff] %v235
  %275 = vst [vmem:[%s4 + $0x28] sm:$0xff] %v238
  %276 = vst [vmem:[%s4 + $0x30] sm:$0xff] %v241
  %277 = vst [vmem:[%s4 + $0x38] sm:$0xff] %v244
  %278 = vst [vmem:[%s4 + $0x40] sm:$0xff] %v247
  %279 = vst [vmem:[%s4 + $0x48] sm:$0xff] %v250
  %280 = vst [vmem:[%s4 + $0x50] sm:$0xff] %v253
  %281 = vst [vmem:[%s4 + $0x58] sm:$0xff] %v256
  %282 = vst [vmem:[%s4 + $0x60] sm:$0xff] %v259
  %283 = vst [vmem:[%s4 + $0x68] sm:$0xff] %v262
  %284 = vst [vmem:[%s4 + $0x70] sm:$0xff] %v265
  %285 = vst [vmem:[%s4 + $0x78] sm:$0xff] %v268
  %v286 = vsel %vm116, 1, 0
  %v287 = vsel %vm117, 1, 0
  %v288 = vsel %vm118, 1, 0
  %v289 = vsel %vm119, 1, 0
  %v290 = vsel %vm120, 1, 0
  %v291 = vsel %vm121, 1, 0
  %v292 = vsel %vm122, 1, 0
  %v293 = vsel %vm123, 1, 0
  %v294 = vsel %vm124, 1, 0
  %v295 = vsel %vm125, 1, 0
  %v296 = vsel %vm126, 1, 0
  %v297 = vsel %vm127, 1, 0
  %v298 = vsel %vm128, 1, 0
  %v299 = vsel %vm129, 1, 0
  %v300 = vsel %vm130, 1, 0
  %v301 = vsel %vm131, 1, 0
  %v302 = vcvt.s32.f32 %v286
  %v303 = vcvt.s32.f32 %v287
  %v304 = vcvt.s32.f32 %v288
  %v305 = vcvt.s32.f32 %v289
  %v306 = vcvt.s32.f32 %v290
  %v307 = vcvt.s32.f32 %v291
  %v308 = vcvt.s32.f32 %v292
  %v309 = vcvt.s32.f32 %v293
  %v310 = vcvt.s32.f32 %v294
  %v311 = vcvt.s32.f32 %v295
  %v312 = vcvt.s32.f32 %v296
  %v313 = vcvt.s32.f32 %v297
  %v314 = vcvt.s32.f32 %v298
  %v315 = vcvt.s32.f32 %v299
  %v316 = vcvt.s32.f32 %v300
  %v317 = vcvt.s32.f32 %v301
  %v318 = vld [vmem:[%s3] sm:$0xff]
  %v319 = vld [vmem:[%s3 + $0x8] sm:$0xff]
  %v320 = vld [vmem:[%s3 + $0x10] sm:$0xff]
  %v321 = vld [vmem:[%s3 + $0x18] sm:$0xff]
  %v322 = vld [vmem:[%s3 + $0x20] sm:$0xff]
  %v323 = vld [vmem:[%s3 + $0x28] sm:$0xff]
  %v324 = vld [vmem:[%s3 + $0x30] sm:$0xff]
  %v325 = vld [vmem:[%s3 + $0x38] sm:$0xff]
  %v327 = vsel %vm156, %v302, 0
  %v330 = vsel %vm156, %v303, 0
  %v333 = vsel %vm156, %v304, 0
  %v336 = vsel %vm156, %v305, 0
  %v339 = vsel %vm156, %v306, 0
  %v342 = vsel %vm156, %v307, 0
  %v345 = vsel %vm156, %v308, 0
  %v348 = vsel %vm156, %v309, 0
  %v351 = vsel %vm156, %v310, 0
  %v354 = vsel %vm156, %v311, 0
  %v357 = vsel %vm156, %v312, 0
  %v360 = vsel %vm156, %v313, 0
  %v363 = vsel %vm156, %v314, 0
  %v366 = vsel %vm156, %v315, 0
  %v369 = vsel %vm156, %v316, 0
  %v372 = vsel %vm156, %v317, 0
  %374 = vmatpush.msra.mxu0 0.0
  %375 = vmatpush.msra.mxu0 0.0
  %376 = vmatpush.msra.mxu0 0.0
  %377 = vmatpush.msra.mxu0 0.0
  %378 = vmatpush.msra.mxu0 0.0
  %379 = vmatpush.msra.mxu0 0.0
  %380 = vmatpush.msra.mxu0 0.0
  %381 = vmatpush.msra.mxu0 0.0
  %382 = vmatpush.msra.mxu0 %v325
  %383 = vmatpush.msra.mxu0 %v324
  %384 = vmatpush.msra.mxu0 %v323
  %385 = vmatpush.msra.mxu0 %v322
  %386 = vmatpush.msra.mxu0 %v321
  %387 = vmatpush.msra.mxu0 %v320
  %388 = vmatpush.msra.mxu0 %v319
  %389 = vmatpush.msra.mxu0 %v318
  %390 = vmatmul.f32.gmra.mxu0 %v327
  %v391 = vpop.f32.mrf.mxu0
  %v392 = vadd.f32 0.0, %v391
  %393 = vmatmul.f32.gmra.mxu0 %v330
  %v394 = vpop.f32.mrf.mxu0
  %v395 = vadd.f32 0.0, %v394
  %396 = vmatmul.f32.gmra.mxu0 %v333
  %v397 = vpop.f32.mrf.mxu0
  %v398 = vadd.f32 0.0, %v397
  %399 = vmatmul.f32.gmra.mxu0 %v336
  %v400 = vpop.f32.mrf.mxu0
  %v401 = vadd.f32 0.0, %v400
  %402 = vmatmul.f32.gmra.mxu0 %v339
  %v403 = vpop.f32.mrf.mxu0
  %v404 = vadd.f32 0.0, %v403
  %405 = vmatmul.f32.gmra.mxu0 %v342
  %v406 = vpop.f32.mrf.mxu0
  %v407 = vadd.f32 0.0, %v406
  %408 = vmatmul.f32.gmra.mxu0 %v345
  %v409 = vpop.f32.mrf.mxu0
  %v410 = vadd.f32 0.0, %v409
  %411 = vmatmul.f32.gmra.mxu0 %v348
  %v412 = vpop.f32.mrf.mxu0
  %v413 = vadd.f32 0.0, %v412
  %414 = vmatmul.f32.gmra.mxu0 %v351
  %v415 = vpop.f32.mrf.mxu0
  %v416 = vadd.f32 0.0, %v415
  %417 = vmatmul.f32.gmra.mxu0 %v354
  %v418 = vpop.f32.mrf.mxu0
  %v419 = vadd.f32 0.0, %v418
  %420 = vmatmul.f32.gmra.mxu0 %v357
  %v421 = vpop.f32.mrf.mxu0
  %v422 = vadd.f32 0.0, %v421
  %423 = vmatmul.f32.gmra.mxu0 %v360
  %v424 = vpop.f32.mrf.mxu0
  %v425 = vadd.f32 0.0, %v424
  %426 = vmatmul.f32.gmra.mxu0 %v363
  %v427 = vpop.f32.mrf.mxu0
  %v428 = vadd.f32 0.0, %v427
  %429 = vmatmul.f32.gmra.mxu0 %v366
  %v430 = vpop.f32.mrf.mxu0
  %v431 = vadd.f32 0.0, %v430
  %432 = vmatmul.f32.gmra.mxu0 %v369
  %v433 = vpop.f32.mrf.mxu0
  %v434 = vadd.f32 0.0, %v433
  %435 = vmatmul.f32.gmra.mxu0 %v372
  %v436 = vpop.f32.mrf.mxu0
  %v437 = vadd.f32 0.0, %v436
  %438 = vdwg.mxu0
  %v439 = vcvt.f32.s32.ties.to.even %v392
  %v440 = vcvt.f32.s32.ties.to.even %v395
  %v441 = vcvt.f32.s32.ties.to.even %v398
  %v442 = vcvt.f32.s32.ties.to.even %v401
  %v443 = vcvt.f32.s32.ties.to.even %v404
  %v444 = vcvt.f32.s32.ties.to.even %v407
  %v445 = vcvt.f32.s32.ties.to.even %v410
  %v446 = vcvt.f32.s32.ties.to.even %v413
  %v447 = vcvt.f32.s32.ties.to.even %v416
  %v448 = vcvt.f32.s32.ties.to.even %v419
  %v449 = vcvt.f32.s32.ties.to.even %v422
  %v450 = vcvt.f32.s32.ties.to.even %v425
  %v451 = vcvt.f32.s32.ties.to.even %v428
  %v452 = vcvt.f32.s32.ties.to.even %v431
  %v453 = vcvt.f32.s32.ties.to.even %v434
  %v454 = vcvt.f32.s32.ties.to.even %v437
  %vm455 = vcmask 31744
  %456 = vst.msk [vmem:[%s5] sm:$0xff] %vm455, %v439
  %457 = vst.msk [vmem:[%s5 + $0x8] sm:$0xff] %vm455, %v440
  %458 = vst.msk [vmem:[%s5 + $0x10] sm:$0xff] %vm455, %v441
  %459 = vst.msk [vmem:[%s5 + $0x18] sm:$0xff] %vm455, %v442
  %460 = vst.msk [vmem:[%s5 + $0x20] sm:$0xff] %vm455, %v443
  %461 = vst.msk [vmem:[%s5 + $0x28] sm:$0xff] %vm455, %v444
  %462 = vst.msk [vmem:[%s5 + $0x30] sm:$0xff] %vm455, %v445
  %463 = vst.msk [vmem:[%s5 + $0x38] sm:$0xff] %vm455, %v446
  %464 = vst.msk [vmem:[%s5 + $0x40] sm:$0xff] %vm455, %v447
  %465 = vst.msk [vmem:[%s5 + $0x48] sm:$0xff] %vm455, %v448
  %466 = vst.msk [vmem:[%s5 + $0x50] sm:$0xff] %vm455, %v449
  %467 = vst.msk [vmem:[%s5 + $0x58] sm:$0xff] %vm455, %v450
  %468 = vst.msk [vmem:[%s5 + $0x60] sm:$0xff] %vm455, %v451
  %469 = vst.msk [vmem:[%s5 + $0x68] sm:$0xff] %vm455, %v452
  %470 = vst.msk [vmem:[%s5 + $0x70] sm:$0xff] %vm455, %v453
  %471 = vst.msk [vmem:[%s5 + $0x78] sm:$0xff] %vm455, %v454
  // Predicated region
  $region18: #{lfq_forward.1} parent=0 // pred_check
    _
  $region19: #{lfq_forward.1} parent=0 // pred_check_branch
    %473 = sbr.rel (0) target = $region21
  $region20: #{lfq_forward.1} parent=0 // pred_region
    _
  $region21: #{lfq_forward.1} parent=0 // pred_fallthru
    _
  // Predicated region
  $region22: #{lfq_forward.1} parent=0 // pred_check
    _
  $region23: #{lfq_forward.1} parent=0 // pred_check_branch
    %475 = sbr.rel (0) target = $region25
  $region24: #{lfq_forward.1} parent=0 // pred_region
    _
  $region25: #{lfq_forward.1} parent=0 // pred_fallthru
    _
  // Predicated region
  $region26: #{lfq_forward.1} parent=0 // pred_check
    _
  $region27: #{lfq_forward.1} parent=0 // pred_check_branch
    %477 = sbr.rel (0) target = $region29
  $region28: #{lfq_forward.1} parent=0 // pred_region
    _
  $region29: #{lfq_forward.1} parent=0 // pred_fallthru
    _
  // Predicated region
  $region30: #{lfq_forward.1} parent=0 // pred_check
    _
  $region31: #{lfq_forward.1} parent=0 // pred_check_branch
    %479 = sbr.rel (0) target = $region33
  $region32: #{lfq_forward.1} parent=0 // pred_region
    _
  $region33: #{lfq_forward.1} parent=0 // pred_fallthru
    _

</llo_original>
